<compile_context>
chip_gen: v7x
topology: tpu7x:2x2x1
jax: 0.10.0
libtpu: 0.0.40
codegen_flags: <defaults>
</compile_context>

<pallas_src>
import functools

import jax
import jax.numpy as jnp
from jax.experimental import pallas as pl
from jax.experimental.pallas import tpu as pltpu


def _edge_recovery_kernel(x0_ref, a_ref, out_ref, x_a, x_b):
    # x0_ref : (N, NP)  f32 initial features (embedded + lane padded in wrapper)
    # a_ref  : (TM, N)  row slab of the dense adjacency (f32 or bf16)
    # out_ref: (1, TM, NP) output slab for (step k, row tile i)
    # x_a/x_b: (N, NP)  f32 carry buffers (ping-pong by step parity)
    k = pl.program_id(0)
    i = pl.program_id(1)
    TM = a_ref.shape[0]
    N = x_a.shape[0]

    # Seed the even-parity carry with X_0 exactly once (first grid step).
    @pl.when(jnp.logical_and(k == 0, i == 0))
    def _seed():
        x_a[...] = x0_ref[...].astype(x_a.dtype)

    a = a_ref[...]

    def _step(src_ref, dst_ref):
        # rows [i*TM, (i+1)*TM) of X_{k+1} = A @ X_k   (f32 accumulation on MXU)
        y = jnp.dot(a, src_ref[...].astype(a.dtype),
                    preferred_element_type=jnp.float32)
        if TM == N:
            dst_ref[...] = y
        else:
            row0 = pl.multiple_of(i * TM, TM)
            dst_ref[pl.ds(row0, TM), :] = y
        # TODO(synk): on v5e (single vector-store slot) this second store of y can
        #             bind; a manual async copy of the carry slab to HBM would avoid it.
        out_ref[0, :, :] = y.astype(out_ref.dtype)

    @pl.when(k % 2 == 0)
    def _even():
        _step(x_a, x_b)

    @pl.when(k % 2 == 1)
    def _odd():
        _step(x_b, x_a)


def _vmem_capacity_bytes(default=128 << 20):
    """Per-core VMEM capacity (generation-aware), with a conservative fallback."""
    try:
        info = pltpu.get_tpu_info()
        for attr in ("vmem_capacity_bytes", "vmem_bytes", "vmem_size_bytes"):
            v = getattr(info, attr, None)
            if v:
                return int(v)
    except Exception:
        pass
    return default


def _pick_row_tile(N, a_itemsize, budget_bytes):
    """Largest row tile keeping A's pipeline buffers under `budget_bytes`."""
    if N * N * a_itemsize <= budget_bytes:
        return N                       # A resident (single-buffered): one HBM fetch total
    # Prefer large streamed slabs (>=128 rows); tiny tiles pay ~0.35us/step overhead
    # and fall well below the HBM roofline.
    for tm in (1024, 512, 256, 128):
        if N % tm == 0 and 2 * tm * N * a_itemsize <= budget_bytes:
            return tm
    for tm in (64, 32, 16):
        if N % tm == 0 and 2 * tm * N * a_itemsize <= budget_bytes:
            return tm
    return N                           # fallback: whole-A block per step


def graph_edge_recovery_forward(node_features, edge_index, edge_weights, Emb, K,
                                emb=True, a_dtype=jnp.bfloat16, block_rows=None):
    """JAX/Pallas equivalent of graph_edgeRecovery.forward."""
    N, E = node_features.shape

    # ---- setup glue (plain XLA) -------------------------------------------------
    # Adjacency scatter: A[edge_index[0], edge_index[1]] = edge_weights.
    # TODO(synk): with duplicate edges PyTorch keeps the last write; JAX .set picks one arbitrarily.
    A = jnp.zeros((N, N), dtype=jnp.float32)
    A = A.at[edge_index[0, :], edge_index[1, :]].set(edge_weights.astype(jnp.float32))
    if a_dtype is not None:
        A = A.astype(a_dtype)

    nin = Emb.shape[1] if emb else E
    NP = max(128, ((nin + 127) // 128) * 128)   # lane-dense padded output width

    # X_0 computed once by XLA (full MXU rate) instead of inside the per-step kernel.
    if emb:
        x0_small = node_features.astype(jnp.float32) @ Emb.astype(jnp.float32)
    else:
        x0_small = node_features.astype(jnp.float32)
    if nin == NP:
        x0 = x0_small
    else:
        x0 = jnp.zeros((N, NP), jnp.float32).at[:, :nin].set(x0_small)

    # ---- tiling / VMEM sizing (generation aware) --------------------------------
    vmem_cap = _vmem_capacity_bytes()
    # Fixed VMEM consumers: 2 f32 carries + X0 + (small) output slabs.
    fixed_bytes = 2 * N * NP * 4 + N * NP * 4
    a_budget = max(4 << 20, int(0.6 * vmem_cap) - fixed_bytes)

    min_rows = 16 if A.dtype == jnp.bfloat16 else 8
    if (block_rows is not None and N % block_rows == 0
            and (block_rows % min_rows == 0 or block_rows == N)):
        TM = block_rows
    else:
        TM = _pick_row_tile(N, A.dtype.itemsize, a_budget)
    NT = N // TM

    vmem_bytes = (2 * TM * N * A.dtype.itemsize   # A slabs (pessimistic: double buffered)
                  + 2 * N * NP * 4                # carries
                  + 2 * x0.size * 4               # X0 (pessimistic: double buffered)
                  + 2 * TM * NP * 4)              # out double buffer
    vmem_limit = int(min(max(vmem_bytes * 3 // 2 + (2 << 20), 16 << 20),
                         int(0.85 * vmem_cap)))

    out_shape = jax.ShapeDtypeStruct((K, N, NP), jnp.float32)
    cparams = pltpu.CompilerParams(
        # K must stay sequential (carry). The row axis also stays "arbitrary":
        # the cross-row carry lives in per-core scratch, so megacore
        # row-parallelism would break correctness (only a column split is safe).
        dimension_semantics=("arbitrary", "arbitrary"),
        vmem_limit_bytes=vmem_limit,
    )

    def _run(single_buffer):
        x0_kw = dict(pipeline_mode=pl.Buffered(1)) if single_buffer else {}
        a_kw = (dict(pipeline_mode=pl.Buffered(1))
                if (single_buffer and NT == 1) else {})
        in_specs = [
            pl.BlockSpec(x0.shape, lambda k, i: (0, 0), **x0_kw),   # fetched once
            pl.BlockSpec((TM, N), lambda k, i: (i, 0), **a_kw),     # A row slabs
        ]
        return pl.pallas_call(
            _edge_recovery_kernel,
            out_shape=out_shape,
            grid=(K, NT),
            in_specs=in_specs,
            out_specs=pl.BlockSpec((1, TM, NP), lambda k, i: (k, i, 0)),
            scratch_shapes=[
                pltpu.VMEM((N, NP), jnp.float32),   # X carry (read on even steps)
                pltpu.VMEM((N, NP), jnp.float32),   # X carry (read on odd steps)
            ],
            compiler_params=cparams,
        )(x0, A)

    try:
        out_padded = _run(True)
    except Exception:
        # Older JAX without single-buffer pipeline_mode support: default buffering.
        out_padded = _run(False)

    return out_padded[:, :, :nin]


if __name__ == "__main__":
    key = jax.random.PRNGKey(0)
    k_emb, k_feat, k_w = jax.random.split(key, 3)

    # Small shapes consistent with the module: N nodes, embdsize input feats,
    # nin output feats, K propagation steps.
    N, embdsize, nin, K = 32, 32, 8, 3

    # graphEmbed.__init__: Emb ~ xavier_uniform(empty(embdsize, nin))
    bound = (6.0 / (embdsize + nin)) ** 0.5
    Emb = jax.random.uniform(k_emb, (embdsize, nin), jnp.float32, -bound, bound)
    node_features = jax.random.normal(k_feat, (N, embdsize), dtype=jnp.float32)

    # Edge set: ring + skip connections (no duplicate edges).
    idx = jnp.arange(N)
    src = jnp.concatenate([idx, idx])
    dst = jnp.concatenate([(idx + 1) % N, (idx + 3) % N])
    edge_index = jnp.stack([src, dst], axis=0).astype(jnp.int32)      # (2, 2N)
    edge_weights = jax.random.uniform(k_w, (edge_index.shape[1],), jnp.float32)

    # Pure-JAX reference (mirrors the PyTorch forward exactly, in f32).
    A_ref = jnp.zeros((N, N), jnp.float32).at[edge_index[0], edge_index[1]].set(edge_weights)

    def reference(x0):
        x = x0
        outs = []
        for _ in range(K):
            x = A_ref @ x
            outs.append(x)
        return jnp.stack(outs, axis=0)

    # 1) emb=True, default bf16 A (A-resident single-tile fast path).
    out_bf16 = graph_edge_recovery_forward(node_features, edge_index, edge_weights,
                                           Emb, K, emb=True)
    out_bf16 = jax.block_until_ready(out_bf16)
    ref = reference(node_features @ Emb)
    assert out_bf16.shape == (K, N, nin), out_bf16.shape
    assert jnp.allclose(out_bf16, ref, atol=5e-2, rtol=5e-2), "emb=True bf16 mismatch"

    # 2) emb=True, f32 A, block_rows=16 forces the multi-tile streaming pipeline.
    out_f32 = graph_edge_recovery_forward(node_features, edge_index, edge_weights,
                                          Emb, K, emb=True,
                                          a_dtype=jnp.float32, block_rows=16)
    out_f32 = jax.block_until_ready(out_f32)
    assert out_f32.shape == (K, N, nin), out_f32.shape
    assert jnp.allclose(out_f32, ref, atol=1e-4, rtol=1e-4), "emb=True f32 mismatch"

    # 3) emb=False path (skips the embedding matmul).
    out_ne = graph_edge_recovery_forward(node_features, edge_index, edge_weights,
                                         Emb, K, emb=False)
    out_ne = jax.block_until_ready(out_ne)
    ref_ne = reference(node_features)
    assert out_ne.shape == (K, N, embdsize), out_ne.shape
    assert jnp.allclose(out_ne, ref_ne, atol=5e-2, rtol=5e-2), "emb=False mismatch"

    print("KERNEL_OK")
</pallas_src>

<mosaic_0001>
module attributes {stable_mosaic.version = 11 : i64} {
  func.func @_edge_recovery_kernel(%arg0: i32, %arg1: i32, %arg2: memref<32x128xf32, #tpu.memory_space<vmem>>, %arg3: memref<32x32xbf16, #tpu.memory_space<vmem>>, %arg4: memref<1x32x128xf32, #tpu.memory_space<vmem>>, %arg5: memref<32x128xf32, #tpu.memory_space<vmem>>, %arg6: memref<32x128xf32, #tpu.memory_space<vmem>>) attributes {dimension_semantics = [#tpu.dimension_semantics<arbitrary>, #tpu.dimension_semantics<arbitrary>], iteration_bounds = array<i64: 3, 1>, scalar_prefetch = 0 : i64, scratch_operands = 2 : i64, tpu.core_type = #tpu.core_type<tc>, window_params = [{pipeline_mode = #tpu.pipeline_mode<synchronous>, transform_indices = @transform_0, window_bounds = array<i64: 32, 128>}, {pipeline_mode = #tpu.pipeline_mode<synchronous>, transform_indices = @transform_1, window_bounds = array<i64: 32, 32>}, {transform_indices = @transform_2, window_bounds = array<i64: 1, 32, 128>}]} {
    %c0_i32 = arith.constant 0 : i32
    %0 = arith.cmpi eq, %arg0, %c0_i32 : i32
    %c0_i32_0 = arith.constant 0 : i32
    %1 = arith.cmpi eq, %arg1, %c0_i32_0 : i32
    %2 = arith.andi %0, %1 : i1
    %3 = arith.extui %2 : i1 to i32
    %c0_i32_1 = arith.constant 0 : i32
    %4 = arith.cmpi ne, %3, %c0_i32_1 : i32
    scf.if %4 {
      %c0_17 = arith.constant 0 : index
      %c0_18 = arith.constant 0 : index
      %32 = vector.load %arg2[%c0_17, %c0_18] : memref<32x128xf32, #tpu.memory_space<vmem>>, vector<32x128xf32>
      %c0_19 = arith.constant 0 : index
      %c0_20 = arith.constant 0 : index
      %33 = vector.load %arg5[%c0_19, %c0_20] : memref<32x128xf32, #tpu.memory_space<vmem>>, vector<32x128xf32>
      tpu.vector_store %arg5[%c0_19, %c0_20], %32 {strides = array<i32>} : memref<32x128xf32, #tpu.memory_space<vmem>>, vector<32x128xf32>,
    } else {
    }
    %c0 = arith.constant 0 : index
    %c0_2 = arith.constant 0 : index
    %5 = vector.load %arg3[%c0, %c0_2] : memref<32x32xbf16, #tpu.memory_space<vmem>>, vector<32x32xbf16>
    %c2_i32 = arith.constant 2 : i32
    %c0_i32_3 = arith.constant 0 : i32
    %6 = arith.cmpi eq, %c2_i32, %c0_i32_3 : i32
    %c1_i32 = arith.constant 1 : i32
    %7 = arith.select %6, %c1_i32, %c2_i32 : i32
    %8 = arith.remsi %arg0, %7 : i32
    %c0_i32_4 = arith.constant 0 : i32
    %9 = arith.cmpi ne, %8, %c0_i32_4 : i32
    %c0_i32_5 = arith.constant 0 : i32
    %10 = arith.cmpi slt, %8, %c0_i32_5 : i32
    %c0_i32_6 = arith.constant 0 : i32
    %11 = arith.cmpi slt, %7, %c0_i32_6 : i32
    %12 = arith.xori %10, %11 : i1
    %13 = arith.andi %12, %9 : i1
    %14 = arith.addi %8, %7 : i32
    %15 = arith.select %13, %14, %8 : i32
    %c0_i32_7 = arith.constant 0 : i32
    %16 = arith.cmpi eq, %15, %c0_i32_7 : i32
    %17 = arith.extui %16 : i1 to i32
    %c0_i32_8 = arith.constant 0 : i32
    %18 = arith.cmpi ne, %17, %c0_i32_8 : i32
    scf.if %18 {
      %c0_17 = arith.constant 0 : index
      %c0_18 = arith.constant 0 : index
      %32 = vector.load %arg5[%c0_17, %c0_18] : memref<32x128xf32, #tpu.memory_space<vmem>>, vector<32x128xf32>
      %33 = arith.truncf %32 : vector<32x128xf32> to vector<32x128xbf16>
      %cst = arith.constant dense<0.000000e+00> : vector<32x128xf32>
      %34 = tpu.matmul %5, %33, %cst {dimension_numbers = #tpu.dot_dimension_numbers<[1], [0], [0], [1], [0, 0, 1, 1], [], []>} : vector<32x32xbf16>, vector<32x128xbf16>, vector<32x128xf32> -> vector<32x128xf32>
      %c0_19 = arith.constant 0 : index
      %c0_20 = arith.constant 0 : index
      %35 = vector.load %arg6[%c0_19, %c0_20] : memref<32x128xf32, #tpu.memory_space<vmem>>, vector<32x128xf32>
      tpu.vector_store %arg6[%c0_19, %c0_20], %34 {strides = array<i32>} : memref<32x128xf32, #tpu.memory_space<vmem>>, vector<32x128xf32>,
      %c0_21 = arith.constant 0 : index
      %c0_22 = arith.constant 0 : index
      %c0_23 = arith.constant 0 : index
      %36 = vector.load %arg4[%c0_21, %c0_22, %c0_23] : memref<1x32x128xf32, #tpu.memory_space<vmem>>, vector<1x32x128xf32>
      %37 = vector.shape_cast %36 : vector<1x32x128xf32> to vector<32x128xf32>
      %38 = vector.shape_cast %34 : vector<32x128xf32> to vector<1x32x128xf32>
      tpu.vector_store %arg4[%c0_21, %c0_22, %c0_23], %38 {strides = array<i32>} : memref<1x32x128xf32, #tpu.memory_space<vmem>>, vector<1x32x128xf32>,
    } else {
    }
    %c2_i32_9 = arith.constant 2 : i32
    %c0_i32_10 = arith.constant 0 : i32
    %19 = arith.cmpi eq, %c2_i32_9, %c0_i32_10 : i32
    %c1_i32_11 = arith.constant 1 : i32
    %20 = arith.select %19, %c1_i32_11, %c2_i32_9 : i32
    %21 = arith.remsi %arg0, %20 : i32
    %c0_i32_12 = arith.constant 0 : i32
    %22 = arith.cmpi ne, %21, %c0_i32_12 : i32
    %c0_i32_13 = arith.constant 0 : i32
    %23 = arith.cmpi slt, %21, %c0_i32_13 : i32
    %c0_i32_14 = arith.constant 0 : i32
    %24 = arith.cmpi slt, %20, %c0_i32_14 : i32
    %25 = arith.xori %23, %24 : i1
    %26 = arith.andi %25, %22 : i1
    %27 = arith.addi %21, %20 : i32
    %28 = arith.select %26, %27, %21 : i32
    %c1_i32_15 = arith.constant 1 : i32
    %29 = arith.cmpi eq, %28, %c1_i32_15 : i32
    %30 = arith.extui %29 : i1 to i32
    %c0_i32_16 = arith.constant 0 : i32
    %31 = arith.cmpi ne, %30, %c0_i32_16 : i32
    scf.if %31 {
      %c0_17 = arith.constant 0 : index
      %c0_18 = arith.constant 0 : index
      %32 = vector.load %arg6[%c0_17, %c0_18] : memref<32x128xf32, #tpu.memory_space<vmem>>, vector<32x128xf32>
      %33 = arith.truncf %32 : vector<32x128xf32> to vector<32x128xbf16>
      %cst = arith.constant dense<0.000000e+00> : vector<32x128xf32>
      %34 = tpu.matmul %5, %33, %cst {dimension_numbers = #tpu.dot_dimension_numbers<[1], [0], [0], [1], [0, 0, 1, 1], [], []>} : vector<32x32xbf16>, vector<32x128xbf16>, vector<32x128xf32> -> vector<32x128xf32>
      %c0_19 = arith.constant 0 : index
      %c0_20 = arith.constant 0 : index
      %35 = vector.load %arg5[%c0_19, %c0_20] : memref<32x128xf32, #tpu.memory_space<vmem>>, vector<32x128xf32>
      tpu.vector_store %arg5[%c0_19, %c0_20], %34 {strides = array<i32>} : memref<32x128xf32, #tpu.memory_space<vmem>>, vector<32x128xf32>,
      %c0_21 = arith.constant 0 : index
      %c0_22 = arith.constant 0 : index
      %c0_23 = arith.constant 0 : index
      %36 = vector.load %arg4[%c0_21, %c0_22, %c0_23] : memref<1x32x128xf32, #tpu.memory_space<vmem>>, vector<1x32x128xf32>
      %37 = vector.shape_cast %36 : vector<1x32x128xf32> to vector<32x128xf32>
      %38 = vector.shape_cast %34 : vector<32x128xf32> to vector<1x32x128xf32>
      tpu.vector_store %arg4[%c0_21, %c0_22, %c0_23], %38 {strides = array<i32>} : memref<1x32x128xf32, #tpu.memory_space<vmem>>, vector<1x32x128xf32>,
    } else {
    }
    return
  }
  func.func @transform_0(%arg0: i32, %arg1: i32) -> (i32, i32) {
    %c0_i32 = arith.constant 0 : i32
    %c0_i32_0 = arith.constant 0 : i32
    %c0_i32_1 = arith.constant 0 : i32
    return %c0_i32, %c0_i32_0 : i32, i32
  }
  func.func @transform_1(%arg0: i32, %arg1: i32) -> (i32, i32) {
    %c0_i32 = arith.constant 0 : i32
    %c0_i32_0 = arith.constant 0 : i32
    return %arg1, %c0_i32 : i32, i32
  }
  func.func @transform_2(%arg0: i32, %arg1: i32) -> (i32, i32, i32) {
    %c0_i32 = arith.constant 0 : i32
    %c0_i32_0 = arith.constant 0 : i32
    return %arg0, %arg1, %c0_i32 : i32, i32, i32
  }
}

module attributes {stable_mosaic.version = 11 : i64} {
  func.func @_edge_recovery_kernel(%arg0: i32, %arg1: i32, %arg2: memref<32x128xf32, #tpu.memory_space<vmem>>, %arg3: memref<32x32xbf16, #tpu.memory_space<vmem>>, %arg4: memref<1x32x128xf32, #tpu.memory_space<vmem>>, %arg5: memref<32x128xf32, #tpu.memory_space<vmem>>, %arg6: memref<32x128xf32, #tpu.memory_space<vmem>>) attributes {dimension_semantics = [#tpu.dimension_semantics<arbitrary>, #tpu.dimension_semantics<arbitrary>], iteration_bounds = array<i64: 3, 1>, scalar_prefetch = 0 : i64, scratch_operands = 2 : i64, tpu.core_type = #tpu.core_type<tc>, window_params = [{pipeline_mode = #tpu.pipeline_mode<synchronous>, transform_indices = @transform_0, window_bounds = array<i64: 32, 128>}, {transform_indices = @transform_1, window_bounds = array<i64: 32, 32>}, {transform_indices = @transform_2, window_bounds = array<i64: 1, 32, 128>}]} {
    %c0_i32 = arith.constant 0 : i32
    %0 = arith.cmpi eq, %arg0, %c0_i32 : i32
    %c0_i32_0 = arith.constant 0 : i32
    %1 = arith.cmpi eq, %arg1, %c0_i32_0 : i32
    %2 = arith.andi %0, %1 : i1
    %3 = arith.extui %2 : i1 to i32
    %c0_i32_1 = arith.constant 0 : i32
    %4 = arith.cmpi ne, %3, %c0_i32_1 : i32
    scf.if %4 {
      %c0_17 = arith.constant 0 : index
      %c0_18 = arith.constant 0 : index
      %32 = vector.load %arg2[%c0_17, %c0_18] : memref<32x128xf32, #tpu.memory_space<vmem>>, vector<32x128xf32>
      %c0_19 = arith.constant 0 : index
      %c0_20 = arith.constant 0 : index
      %33 = vector.load %arg5[%c0_19, %c0_20] : memref<32x128xf32, #tpu.memory_space<vmem>>, vector<32x128xf32>
      tpu.vector_store %arg5[%c0_19, %c0_20], %32 {strides = array<i32>} : memref<32x128xf32, #tpu.memory_space<vmem>>, vector<32x128xf32>,
    } else {
    }
    %c0 = arith.constant 0 : index
    %c0_2 = arith.constant 0 : index
    %5 = vector.load %arg3[%c0, %c0_2] : memref<32x32xbf16, #tpu.memory_space<vmem>>, vector<32x32xbf16>
    %c2_i32 = arith.constant 2 : i32
    %c0_i32_3 = arith.constant 0 : i32
    %6 = arith.cmpi eq, %c2_i32, %c0_i32_3 : i32
    %c1_i32 = arith.constant 1 : i32
    %7 = arith.select %6, %c1_i32, %c2_i32 : i32
    %8 = arith.remsi %arg0, %7 : i32
    %c0_i32_4 = arith.constant 0 : i32
    %9 = arith.cmpi ne, %8, %c0_i32_4 : i32
    %c0_i32_5 = arith.constant 0 : i32
    %10 = arith.cmpi slt, %8, %c0_i32_5 : i32
    %c0_i32_6 = arith.constant 0 : i32
    %11 = arith.cmpi slt, %7, %c0_i32_6 : i32
    %12 = arith.xori %10, %11 : i1
    %13 = arith.andi %12, %9 : i1
    %14 = arith.addi %8, %7 : i32
    %15 = arith.select %13, %14, %8 : i32
    %c0_i32_7 = arith.constant 0 : i32
    %16 = arith.cmpi eq, %15, %c0_i32_7 : i32
    %17 = arith.extui %16 : i1 to i32
    %c0_i32_8 = arith.constant 0 : i32
    %18 = arith.cmpi ne, %17, %c0_i32_8 : i32
    scf.if %18 {
      %c0_17 = arith.constant 0 : index
      %c0_18 = arith.constant 0 : index
      %32 = vector.load %arg5[%c0_17, %c0_18] : memref<32x128xf32, #tpu.memory_space<vmem>>, vector<32x128xf32>
      %33 = arith.truncf %32 : vector<32x128xf32> to vector<32x128xbf16>
      %cst = arith.constant dense<0.000000e+00> : vector<32x128xf32>
      %34 = tpu.matmul %5, %33, %cst {dimension_numbers = #tpu.dot_dimension_numbers<[1], [0], [0], [1], [0, 0, 1, 1], [], []>} : vector<32x32xbf16>, vector<32x128xbf16>, vector<32x128xf32> -> vector<32x128xf32>
      %c0_19 = arith.constant 0 : index
      %c0_20 = arith.constant 0 : index
      %35 = vector.load %arg6[%c0_19, %c0_20] : memref<32x128xf32, #tpu.memory_space<vmem>>, vector<32x128xf32>
      tpu.vector_store %arg6[%c0_19, %c0_20], %34 {strides = array<i32>} : memref<32x128xf32, #tpu.memory_space<vmem>>, vector<32x128xf32>,
      %c0_21 = arith.constant 0 : index
      %c0_22 = arith.constant 0 : index
      %c0_23 = arith.constant 0 : index
      %36 = vector.load %arg4[%c0_21, %c0_22, %c0_23] : memref<1x32x128xf32, #tpu.memory_space<vmem>>, vector<1x32x128xf32>
      %37 = vector.shape_cast %36 : vector<1x32x128xf32> to vector<32x128xf32>
      %38 = vector.shape_cast %34 : vector<32x128xf32> to vector<1x32x128xf32>
      tpu.vector_store %arg4[%c0_21, %c0_22, %c0_23], %38 {strides = array<i32>} : memref<1x32x128xf32, #tpu.memory_space<vmem>>, vector<1x32x128xf32>,
    } else {
    }
    %c2_i32_9 = arith.constant 2 : i32
    %c0_i32_10 = arith.constant 0 : i32
    %19 = arith.cmpi eq, %c2_i32_9, %c0_i32_10 : i32
    %c1_i32_11 = arith.constant 1 : i32
    %20 = arith.select %19, %c1_i32_11, %c2_i32_9 : i32
    %21 = arith.remsi %arg0, %20 : i32
    %c0_i32_12 = arith.constant 0 : i32
    %22 = arith.cmpi ne, %21, %c0_i32_12 : i32
    %c0_i32_13 = arith.constant 0 : i32
    %23 = arith.cmpi slt, %21, %c0_i32_13 : i32
    %c0_i32_14 = arith.constant 0 : i32
    %24 = arith.cmpi slt, %20, %c0_i32_14 : i32
    %25 = arith.xori %23, %24 : i1
    %26 = arith.andi %25, %22 : i1
    %27 = arith.addi %21, %20 : i32
    %28 = arith.select %26, %27, %21 : i32
    %c1_i32_15 = arith.constant 1 : i32
    %29 = arith.cmpi eq, %28, %c1_i32_15 : i32
    %30 = arith.extui %29 : i1 to i32
    %c0_i32_16 = arith.constant 0 : i32
    %31 = arith.cmpi ne, %30, %c0_i32_16 : i32
    scf.if %31 {
      %c0_17 = arith.constant 0 : index
      %c0_18 = arith.constant 0 : index
      %32 = vector.load %arg6[%c0_17, %c0_18] : memref<32x128xf32, #tpu.memory_space<vmem>>, vector<32x128xf32>
      %33 = arith.truncf %32 : vector<32x128xf32> to vector<32x128xbf16>
      %cst = arith.constant dense<0.000000e+00> : vector<32x128xf32>
      %34 = tpu.matmul %5, %33, %cst {dimension_numbers = #tpu.dot_dimension_numbers<[1], [0], [0], [1], [0, 0, 1, 1], [], []>} : vector<32x32xbf16>, vector<32x128xbf16>, vector<32x128xf32> -> vector<32x128xf32>
      %c0_19 = arith.constant 0 : index
      %c0_20 = arith.constant 0 : index
      %35 = vector.load %arg5[%c0_19, %c0_20] : memref<32x128xf32, #tpu.memory_space<vmem>>, vector<32x128xf32>
      tpu.vector_store %arg5[%c0_19, %c0_20], %34 {strides = array<i32>} : memref<32x128xf32, #tpu.memory_space<vmem>>, vector<32x128xf32>,
      %c0_21 = arith.constant 0 : index
      %c0_22 = arith.constant 0 : index
      %c0_23 = arith.constant 0 : index
      %36 = vector.load %arg4[%c0_21, %c0_22, %c0_23] : memref<1x32x128xf32, #tpu.memory_space<vmem>>, vector<1x32x128xf32>
      %37 = vector.shape_cast %36 : vector<1x32x128xf32> to vector<32x128xf32>
      %38 = vector.shape_cast %34 : vector<32x128xf32> to vector<1x32x128xf32>
      tpu.vector_store %arg4[%c0_21, %c0_22, %c0_23], %38 {strides = array<i32>} : memref<1x32x128xf32, #tpu.memory_space<vmem>>, vector<1x32x128xf32>,
    } else {
    }
    return
  }
  func.func @transform_0(%arg0: i32, %arg1: i32) -> (i32, i32) {
    %c0_i32 = arith.constant 0 : i32
    %c0_i32_0 = arith.constant 0 : i32
    %c0_i32_1 = arith.constant 0 : i32
    return %c0_i32, %c0_i32_0 : i32, i32
  }
  func.func @transform_1(%arg0: i32, %arg1: i32) -> (i32, i32) {
    %c0_i32 = arith.constant 0 : i32
    %c0_i32_0 = arith.constant 0 : i32
    return %arg1, %c0_i32 : i32, i32
  }
  func.func @transform_2(%arg0: i32, %arg1: i32) -> (i32, i32, i32) {
    %c0_i32 = arith.constant 0 : i32
    %c0_i32_0 = arith.constant 0 : i32
    return %arg0, %arg1, %c0_i32 : i32, i32, i32
  }
}

</mosaic_0001>

<llo_original>
// kernel: tpu_custom_call.1
$region0: #{tpu_custom_call.1}
  #allocation0 [shape = 'u32[]', space=smem, size = 0x4, offset = 0x4, fixed_abs, tag = 'smem constant byte address 0x4 - core index']
  #allocation1 [shape = 'u32[144,128]{1,0:T(1,128)}', space=vmem, size = 0x12000, scoped, tag = 'internal scratch']
  #allocation2 [shape = 'f32[32,128]{1,0:T(8,128)}', space=vmem, size = 0x4000, scoped, tag = 'scratch operand']
  #allocation3 [shape = 'f32[32,128]{1,0:T(8,128)}', space=vmem, size = 0x4000, scoped, tag = 'scratch operand']
  %s0 = inlined_call_operand.hbm [shape: f32[32,128], index: 0, kind: input, shape index: {}]
  %s1 = inlined_call_operand.hbm [shape: bf16[32,32], index: 1, kind: input, shape index: {}]
  %s2 = inlined_call_operand.hbm [shape: f32[3,32,128], index: 2, kind: output, shape index: {}]
  %s3 = sld [smem:[#allocation0]]
  $region61: #{tpu_custom_call.1} parent=0
    _
  %s5 = ssub.s32 1, %s3
  %s6 = scalar_select 0, %s5, %s3
  $region1: #{tpu_custom_call.1} parent=0
    #allocation4 [shape = 'u8[16384]{0}', space=vmem, size = 0x4000, scoped, tag = 'input window, operand 0, single buffered']
    #allocation5 [shape = 's32[2]{0}', space=sflag, size = 0x8, scoped, tag = 'scoped memory for tpu_custom_call.1']
    #allocation6 [shape = 's32[2]{0}', space=sflag, size = 0x8, scoped, tag = 'scoped memory for tpu_custom_call.1']
    #allocation7 [shape = 'u8[8192]{0}', space=vmem, size = 0x2000, scoped, tag = 'input window, operand 1, single buffered']
    #allocation8 [shape = 's32[1]{0}', space=sflag, size = 0x4, scoped, tag = 'scoped memory for tpu_custom_call.1']
    #allocation9 [shape = 'u8[32768]{0}', space=vmem, size = 0x8000, scoped, tag = 'output window, operand 0']
    %7 = vsyncpa [#allocation5], 0
    %8 = vsyncpa [#allocation8], 0
    %9 = vsyncpa [#allocation6], 0
    %s10 = scalar_lea.sflag [#allocation6], 1
    %11 = vsyncpa %s10, 0
    loop: start=0, step=1, limit=5
    $region2: #{tpu_custom_call.1} parent=1 // loop_pre_header
      _
    $region3: #{tpu_custom_call.1} parent=1 // loop_header
      %s13 = sphi 0, %s17
      %p14 = scmp.ge.s32.totalorder %s13, 5
      %s20 = sphi 0, %s32
      %s21 = sphi 0, %s28
      %s22 = sphi 0, %s20
      %s23 = sphi 0, %s21
      %s24 = sphi 0, %s22
      %s25 = sphi 0, %s23
      %s33 = sphi 0, %s33
      %s35 = sphi 0, %s33
      %s36 = sphi 0, %s35
      %s50 = sphi 0, %s36
      %s56 = sphi 0, %s58
      %s59 = sphi 0, %s56
      %s60 = sphi 0, %s59
      %s76 = sphi 0, %s60
      %s84 = sphi 0, %s86
      %s87 = sphi 0, %s84
      %s88 = sphi 0, %s87
      %s104 = sphi 0, %s88
    $region4: #{tpu_custom_call.1} parent=1 // loop_header_branch
      %16 = sbr.rel (%p14) target = $region8
    $region5: #{tpu_custom_call.1} parent=1 // loop_body
      %s18 = ssub.s32 %s13, 1
      %s19 = ssub.s32 %s13, 2
      %s26 = sadd.s32 1, %s21
      %p27 = scmp.ge.s32.totalorder %s26, 1
      %s28 = scalar_select %p27, 0, %s26
      %s29 = sadd.s32 1, %s20
      %s30 = scalar_select %p27, %s29, %s20
      %p31 = scmp.ge.s32.totalorder %s30, 3
      %s32 = scalar_select %p31, 0, %s30
      %s34 = sadd.s32 %s33, 1
      %p37 = scmp.eq.s32.totalorder %s13, 2
      %p38 = scmp.ne.s32.totalorder %s33, %s35
      %p39 = scmp.eq.s32.totalorder %s13, 0
      %p40 = por %p38, %p39
      %p41 = scmp.ne.s32.totalorder %s33, %s35
      %p42 = scmp.eq.s32.totalorder %s18, 2
      %p43 = por %p41, %p42
      %p44 = scmp.ne.s32.totalorder %s35, %s36
      %p45 = scmp.eq.s32.totalorder %s18, 0
      %p46 = por %p44, %p45
      %p47 = scmp.ne.s32.totalorder %s35, %s36
      %p48 = scmp.eq.s32.totalorder %s19, 2
      %p49 = por %p47, %p48
      %p51 = scmp.ne.s32.totalorder %s36, %s50
      %p52 = scmp.eq.s32.totalorder %s19, 0
      %p53 = por %p51, %p52
      %s54 = ssub.s32 %s21, %s28
      %p55 = scmp.eq.s32.totalorder %s54, 0
      %s57 = sadd.s32 %s56, 1
      %s58 = scalar_select %p55, %s56, %s57
      %p61 = pneg %p55
      %p62 = scmp.eq.s32.totalorder %s13, 2
      %p63 = por %p61, %p62
      %p64 = scmp.ne.s32.totalorder %s56, %s59
      %p65 = scmp.eq.s32.totalorder %s13, 0
      %p66 = por %p64, %p65
      %p67 = scmp.ne.s32.totalorder %s56, %s59
      %p68 = scmp.eq.s32.totalorder %s18, 2
      %p69 = por %p67, %p68
      %p70 = scmp.ne.s32.totalorder %s59, %s60
      %p71 = scmp.eq.s32.totalorder %s18, 0
      %p72 = por %p70, %p71
      %p73 = scmp.ne.s32.totalorder %s59, %s60
      %p74 = scmp.eq.s32.totalorder %s19, 2
      %p75 = por %p73, %p74
      %p77 = scmp.ne.s32.totalorder %s60, %s76
      %p78 = scmp.eq.s32.totalorder %s19, 0
      %p79 = por %p77, %p78
      %s80 = ssub.s32 %s20, %s32
      %s81 = ssub.s32 %s21, %s28
      %s82 = sor.u32 %s80, %s81
      %p83 = scmp.eq.s32.totalorder %s82, 0
      %s85 = sadd.s32 %s84, 1
      %s86 = scalar_select %p83, %s84, %s85
      %p89 = pneg %p83
      %p90 = scmp.eq.s32.totalorder %s13, 2
      %p91 = por %p89, %p90
      %p92 = scmp.ne.s32.totalorder %s84, %s87
      %p93 = scmp.eq.s32.totalorder %s13, 0
      %p94 = por %p92, %p93
      %p95 = scmp.ne.s32.totalorder %s84, %s87
      %p96 = scmp.eq.s32.totalorder %s18, 2
      %p97 = por %p95, %p96
      %p98 = scmp.ne.s32.totalorder %s87, %s88
      %p99 = scmp.eq.s32.totalorder %s18, 0
      %p100 = por %p98, %p99
      %p101 = scmp.ne.s32.totalorder %s87, %s88
      %p102 = scmp.eq.s32.totalorder %s19, 2
      %p103 = por %p101, %p102
      %p105 = scmp.ne.s32.totalorder %s88, %s104
      %p106 = scmp.eq.s32.totalorder %s19, 0
      %p107 = por %p105, %p106
      %p108 = scmp.le.s32.totalorder 1, %s13
      %p109 = scmp.lt.s32.totalorder %s13, 4
      %p110 = pnand %p108, %p109
      %p111 = pneg %p110
      // Predicated region
      $region9: #{tpu_custom_call.1} parent=5 // pred_check
        _
      $region10: #{tpu_custom_call.1} parent=5 // pred_check_branch
        %113 = sbr.rel (%p110) target = $region12
      $region11: #{tpu_custom_call.1} parent=5 // pred_region
        %s114 = ssub.s32 %s13, 1
        // Predicated region
        $region13: #{tpu_custom_call.1} parent=11 // pred_check
          %p115 = pneg %p46
        $region14: #{tpu_custom_call.1} parent=11 // pred_check_branch
          %117 = sbr.rel (%p115) target = $region16
        $region15: #{tpu_custom_call.1} parent=11 // pred_region
          %s119 = ssub.s32 512, 512
          %120 = vsyncadd [#allocation5], %s119
          %s121 = sshll.u32 [#allocation4], 4
          %s122 = int_to_ptr.vmem [resolvable:$true] %s121
          %127 = dma.hbm_to_vmem [thread:$0]  %s0, 512, %s122, [#allocation5], 128, 128, 8
        $region16: #{tpu_custom_call.1} parent=11 // pred_fallthru
          _
        // Predicated region
        $region17: #{tpu_custom_call.1} parent=11 // pred_check
          %p128 = pneg %p72
        $region18: #{tpu_custom_call.1} parent=11 // pred_check_branch
          %130 = sbr.rel (%p128) target = $region20
        $region19: #{tpu_custom_call.1} parent=11 // pred_region
          %s131 = smul.u32 4, %s23
          %s133 = ssub.s32 256, 256
          %134 = vsyncadd [#allocation8], %s133
          %s135 = smul.addr %s131, 64
          %s136 = scalar_lea.hbm %s1, %s135
          %s137 = sshll.u32 [#allocation7], 4
          %s138 = int_to_ptr.vmem [resolvable:$true] %s137
          %143 = dma.hbm_to_vmem [thread:$0]  %s136, 256, %s138, [#allocation8], 64, 64, 4
        $region20: #{tpu_custom_call.1} parent=11 // pred_fallthru
          _
      $region12: #{tpu_custom_call.1} parent=5 // pred_fallthru
        _
      %p144 = scmp.lt.s32.totalorder %s13, 3
      // Predicated region
      $region21: #{tpu_custom_call.1} parent=5 // pred_check
        %p145 = pneg %p144
      $region22: #{tpu_custom_call.1} parent=5 // pred_check_branch
        %147 = sbr.rel (%p145) target = $region24
      $region23: #{tpu_custom_call.1} parent=5 // pred_region
        _
      $region24: #{tpu_custom_call.1} parent=5 // pred_fallthru
        _
      %p148 = scmp.le.s32.totalorder 1, %s13
      %p149 = scmp.lt.s32.totalorder %s13, 4
      %p150 = pnand %p148, %p149
      %p151 = pneg %p150
      // Predicated region
      $region25: #{tpu_custom_call.1} parent=5 // pred_check
        _
      $region26: #{tpu_custom_call.1} parent=5 // pred_check_branch
        %153 = sbr.rel (%p150) target = $region28
      $region27: #{tpu_custom_call.1} parent=5 // pred_region
        %s154 = ssub.s32 %s13, 1
        // Predicated region
        $region29: #{tpu_custom_call.1} parent=27 // pred_check
          %p155 = pneg %p46
        $region30: #{tpu_custom_call.1} parent=27 // pred_check_branch
          %157 = sbr.rel (%p155) target = $region32
        $region31: #{tpu_custom_call.1} parent=27 // pred_region
          %158 = dma.done [#allocation5], 512
        $region32: #{tpu_custom_call.1} parent=27 // pred_fallthru
          _
        // Predicated region
        $region33: #{tpu_custom_call.1} parent=27 // pred_check
          %p159 = pneg %p72
        $region34: #{tpu_custom_call.1} parent=27 // pred_check_branch
          %161 = sbr.rel (%p159) target = $region36
        $region35: #{tpu_custom_call.1} parent=27 // pred_region
          %162 = dma.done [#allocation8], 256
        $region36: #{tpu_custom_call.1} parent=27 // pred_fallthru
          _
        %p163 = pneg %p46
        %p164 = pneg %p43
        %p165 = pneg %p72
        %p166 = pneg %p69
        %p167 = pneg %p100
        %p168 = pneg %p97
        %s169 = sand.u32 %s87, 1
        %s170 = scalar_lea.sflag [#allocation6], %s169
        %s171 = sand.u32 %s87, 1
        %s172 = smul.addr %s171, 32
        %s173 = scalar_lea.vmem [#allocation9], %s172
        %s174 = smul.u32 4, %s23
        %s175 = smul.u32 4, %s23
        %p177 = scmp.eq.s32.totalorder %s22, 0
        %p178 = scmp.eq.s32.totalorder %s23, 0
        %p179 = pnand %p177, %p178
        %p180 = pneg %p179
        // Predicated region
        $region37: #{tpu_custom_call.1} parent=27 // pred_check
          _
        $region38: #{tpu_custom_call.1} parent=27 // pred_check_branch
          %182 = sbr.rel (%p179) target = $region40
        $region39: #{tpu_custom_call.1} parent=27 // pred_region
          %v183 = vld [vmem:[#allocation4] sm:$0xff]
          %v184 = vld [vmem:[#allocation4 + $0x8] sm:$0xff]
          %v185 = vld [vmem:[#allocation4 + $0x10] sm:$0xff]
          %v186 = vld [vmem:[#allocation4 + $0x18] sm:$0xff]
          %187 = vst [vmem:[#allocation2] sm:$0xff] %v183
          %188 = vst [vmem:[#allocation2 + $0x8] sm:$0xff] %v184
          %189 = vst [vmem:[#allocation2 + $0x10] sm:$0xff] %v185
          %190 = vst [vmem:[#allocation2 + $0x18] sm:$0xff] %v186
        $region40: #{tpu_custom_call.1} parent=27 // pred_fallthru
          _
        %v191 = vld [vmem:[#allocation7] sm:$0xf]
        %v192 = vld [vmem:[#allocation7 + $0x4] sm:$0xf]
        %v193 = vld [vmem:[#allocation7 + $0x8] sm:$0xf]
        %v194 = vld [vmem:[#allocation7 + $0xc] sm:$0xf]
        %p195 = scmp.lt.s32.totalorder %s22, 0
        %s196 = ssub.s32 0, %s22
        %s197 = scalar_select %p195, %s196, %s22
        %s198 = sand.u32 %s197, 1
        %s199 = ssub.s32 0, %s198
        %s200 = scalar_select %p195, %s199, %s198
        %p201 = scmp.ne.s32.totalorder %s200, 0
        %p202 = scmp.lt.s32.totalorder %s200, 0
        %p203 = pnand %p202, %p201
        %p204 = pneg %p203
        %s205 = sadd.s32 %s200, 2
        %s206 = scalar_select %p204, %s205, %s200
        %p207 = scmp.eq.s32.totalorder %s206, 0
        // Predicated region
        $region41: #{tpu_custom_call.1} parent=27 // pred_check
          %p208 = pneg %p207
        $region42: #{tpu_custom_call.1} parent=27 // pred_check_branch
          %210 = sbr.rel (%p208) target = $region44
        $region43: #{tpu_custom_call.1} parent=27 // pred_region
          %v211 = vld [vmem:[#allocation2] sm:$0xff]
          %v212 = vld [vmem:[#allocation2 + $0x8] sm:$0xff]
          %v213 = vld [vmem:[#allocation2 + $0x10] sm:$0xff]
          %v214 = vld [vmem:[#allocation2 + $0x18] sm:$0xff]
          %v215 = vpack.c.bf16 %v212, %v211
          %v216 = vpack.c.bf16 %v214, %v213
          %v221 = vunpack.c.l.b16 %v191
          %v222 = vunpack.c.l.b16 %v192
          %v223 = vunpack.c.l.b16 %v193
          %v224 = vunpack.c.l.b16 %v194
          %v225 = vpack.c.b16 %v222, %v221
          %v226 = vpack.c.b16 %v224, %v223
          %vm227 = vcmask 261120
          %v229 = vsel %vm227, %v225, 0
          %v232 = vsel %vm227, %v226, 0
          %234 = vmatprep.subr.bf16.mxu0 0
          %235 = vmatpush1.bf16.msra.mxu0 %v215
          %236 = vmatprep.subr.bf16.mxu0 0
          %237 = vmatpush1.bf16.msra.mxu0 %v216
          %238 = vmatprep.subr.bf16.mxu0 0
          %239 = vmatpush1.bf16.msra.mxu0 0
          %240 = vmatprep.subr.bf16.mxu0 0
          %241 = vmatpush1.bf16.msra.mxu0 0
          %242 = vmatprep.subr.bf16.mxu0 0
          %243 = vmatpush1.bf16.msra.mxu0 0
          %244 = vmatprep.subr.bf16.mxu0 0
          %245 = vmatpush1.bf16.msra.mxu0 0
          %246 = vmatprep.subr.bf16.mxu0 0
          %247 = vmatpush1.bf16.msra.mxu0 0
          %248 = vmatprep.subr.bf16.mxu0 0
          %249 = vmatpush1.bf16.msra.mxu0 0
          %250 = vmatprep.subr.bf16.mxu0 0
          %251 = vmatpush1.bf16.msra.mxu0 0
          %252 = vmatprep.subr.bf16.mxu0 0
          %253 = vmatpush1.bf16.msra.mxu0 0
          %254 = vmatprep.subr.bf16.mxu0 0
          %255 = vmatpush1.bf16.msra.mxu0 0
          %256 = vmatprep.subr.bf16.mxu0 0
          %257 = vmatpush1.bf16.msra.mxu0 0
          %258 = vmatprep.subr.bf16.mxu0 0
          %259 = vmatpush1.bf16.msra.mxu0 0
          %260 = vmatprep.subr.bf16.mxu0 0
          %261 = vmatpush1.bf16.msra.mxu0 0
          %262 = vmatprep.subr.bf16.mxu0 0
          %263 = vmatpush1.bf16.msra.mxu0 0
          %264 = vmatprep.subr.bf16.mxu0 0
          %265 = vmatpush1.bf16.msra.mxu0 0
          %266 = vmatprep.mubr.bf16.mxu0 0
          %267 = vmatmul.mubr.bf16.gmra.mrb[0].mxu0 %v229
          %v268 = vpop.f32.mrb[0].mxu0
          %v269 = vadd.f32 0.0, %v268
          %v270 = vpop.f32.mrb[0].mxu0
          %v271 = vpop.f32.mrb[0].mxu0
          %v272 = vadd.f32 0.0, %v271
          %v273 = vpop.f32.mrb[0].mxu0
          %274 = vmatprep.mubr.bf16.mxu0 0
          %275 = vmatmul.mubr.bf16.gmra.mrb[0].mxu0 %v232
          %v276 = vpop.f32.mrb[0].mxu0
          %v277 = vadd.f32 0.0, %v276
          %v278 = vpop.f32.mrb[0].mxu0
          %v279 = vpop.f32.mrb[0].mxu0
          %v280 = vadd.f32 0.0, %v279
          %v281 = vpop.f32.mrb[0].mxu0
          %282 = vdwg.mxu0
          %283 = vst [vmem:[#allocation3] sm:$0xff] %v269
          %284 = vst [vmem:[#allocation3 + $0x8] sm:$0xff] %v272
          %285 = vst [vmem:[#allocation3 + $0x10] sm:$0xff] %v277
          %286 = vst [vmem:[#allocation3 + $0x18] sm:$0xff] %v280
          %287 = vst [vmem:[%s173] sm:$0xff] %v269
          %288 = vst [vmem:[%s173 + $0x8] sm:$0xff] %v272
          %289 = vst [vmem:[%s173 + $0x10] sm:$0xff] %v277
          %290 = vst [vmem:[%s173 + $0x18] sm:$0xff] %v280
        $region44: #{tpu_custom_call.1} parent=27 // pred_fallthru
          _
        %p291 = scmp.eq.s32.totalorder %s206, 1
        // Predicated region
        $region45: #{tpu_custom_call.1} parent=27 // pred_check
          %p292 = pneg %p291
        $region46: #{tpu_custom_call.1} parent=27 // pred_check_branch
          %294 = sbr.rel (%p292) target = $region48
        $region47: #{tpu_custom_call.1} parent=27 // pred_region
          %v295 = vld [vmem:[#allocation3] sm:$0xff]
          %v296 = vld [vmem:[#allocation3 + $0x8] sm:$0xff]
          %v297 = vld [vmem:[#allocation3 + $0x10] sm:$0xff]
          %v298 = vld [vmem:[#allocation3 + $0x18] sm:$0xff]
          %v299 = vpack.c.bf16 %v296, %v295
          %v300 = vpack.c.bf16 %v298, %v297
          %v305 = vunpack.c.l.b16 %v191
          %v306 = vunpack.c.l.b16 %v192
          %v307 = vunpack.c.l.b16 %v193
          %v308 = vunpack.c.l.b16 %v194
          %v309 = vpack.c.b16 %v306, %v305
          %v310 = vpack.c.b16 %v308, %v307
          %vm311 = vcmask 261120
          %v313 = vsel %vm311, %v309, 0
          %v316 = vsel %vm311, %v310, 0
          %318 = vmatprep.subr.bf16.mxu0 0
          %319 = vmatpush1.bf16.msra.mxu0 %v299
          %320 = vmatprep.subr.bf16.mxu0 0
          %321 = vmatpush1.bf16.msra.mxu0 %v300
          %322 = vmatprep.subr.bf16.mxu0 0
          %323 = vmatpush1.bf16.msra.mxu0 0
          %324 = vmatprep.subr.bf16.mxu0 0
          %325 = vmatpush1.bf16.msra.mxu0 0
          %326 = vmatprep.subr.bf16.mxu0 0
          %327 = vmatpush1.bf16.msra.mxu0 0
          %328 = vmatprep.subr.bf16.mxu0 0
          %329 = vmatpush1.bf16.msra.mxu0 0
          %330 = vmatprep.subr.bf16.mxu0 0
          %331 = vmatpush1.bf16.msra.mxu0 0
          %332 = vmatprep.subr.bf16.mxu0 0
          %333 = vmatpush1.bf16.msra.mxu0 0
          %334 = vmatprep.subr.bf16.mxu0 0
          %335 = vmatpush1.bf16.msra.mxu0 0
          %336 = vmatprep.subr.bf16.mxu0 0
          %337 = vmatpush1.bf16.msra.mxu0 0
          %338 = vmatprep.subr.bf16.mxu0 0
          %339 = vmatpush1.bf16.msra.mxu0 0
          %340 = vmatprep.subr.bf16.mxu0 0
          %341 = vmatpush1.bf16.msra.mxu0 0
          %342 = vmatprep.subr.bf16.mxu0 0
          %343 = vmatpush1.bf16.msra.mxu0 0
          %344 = vmatprep.subr.bf16.mxu0 0
          %345 = vmatpush1.bf16.msra.mxu0 0
          %346 = vmatprep.subr.bf16.mxu0 0
          %347 = vmatpush1.bf16.msra.mxu0 0
          %348 = vmatprep.subr.bf16.mxu0 0
          %349 = vmatpush1.bf16.msra.mxu0 0
          %350 = vmatprep.mubr.bf16.mxu0 0
          %351 = vmatmul.mubr.bf16.gmra.mrb[0].mxu0 %v313
          %v352 = vpop.f32.mrb[0].mxu0
          %v353 = vadd.f32 0.0, %v352
          %v354 = vpop.f32.mrb[0].mxu0
          %v355 = vpop.f32.mrb[0].mxu0
          %v356 = vadd.f32 0.0, %v355
          %v357 = vpop.f32.mrb[0].mxu0
          %358 = vmatprep.mubr.bf16.mxu0 0
          %359 = vmatmul.mubr.bf16.gmra.mrb[0].mxu0 %v316
          %v360 = vpop.f32.mrb[0].mxu0
          %v361 = vadd.f32 0.0, %v360
          %v362 = vpop.f32.mrb[0].mxu0
          %v363 = vpop.f32.mrb[0].mxu0
          %v364 = vadd.f32 0.0, %v363
          %v365 = vpop.f32.mrb[0].mxu0
          %366 = vdwg.mxu0
          %367 = vst [vmem:[#allocation2] sm:$0xff] %v353
          %368 = vst [vmem:[#allocation2 + $0x8] sm:$0xff] %v356
          %369 = vst [vmem:[#allocation2 + $0x10] sm:$0xff] %v361
          %370 = vst [vmem:[#allocation2 + $0x18] sm:$0xff] %v364
          %371 = vst [vmem:[%s173] sm:$0xff] %v353
          %372 = vst [vmem:[%s173 + $0x8] sm:$0xff] %v356
          %373 = vst [vmem:[%s173 + $0x10] sm:$0xff] %v361
          %374 = vst [vmem:[%s173 + $0x18] sm:$0xff] %v364
        $region48: #{tpu_custom_call.1} parent=27 // pred_fallthru
          _
        %s375 = sand.u32 %s87, 1
        %s376 = scalar_lea.sflag [#allocation6], %s375
        %s377 = sand.u32 %s87, 1
        %s378 = smul.addr %s377, 32
        %s379 = scalar_lea.vmem [#allocation9], %s378
        // Predicated region
        $region49: #{tpu_custom_call.1} parent=27 // pred_check
          %p380 = pneg %p97
        $region50: #{tpu_custom_call.1} parent=27 // pred_check_branch
          %382 = sbr.rel (%p380) target = $region52
        $region51: #{tpu_custom_call.1} parent=27 // pred_region
          %s383 = smul.u32 4, %s23
          %s385 = ssub.s32 512, 512
          %386 = vsyncadd %s376, %s385
          %s387 = smul.addr %s22, 4
          %s388 = sadd.s32 %s383, %s387
          %s389 = smul.addr %s388, 128
          %s390 = scalar_lea.hbm %s2, %s389
          %s391 = sshll.u32 %s379, 4
          %s392 = int_to_ptr.vmem [resolvable:$true] %s391
          %397 = dma.vmem_to_hbm [thread:$0]  %s392, 512, %s390, %s376, 128, 128, 8
        $region52: #{tpu_custom_call.1} parent=27 // pred_fallthru
          _
      $region28: #{tpu_custom_call.1} parent=5 // pred_fallthru
        _
      %p398 = scmp.le.s32.totalorder 2, %s13
      // Predicated region
      $region53: #{tpu_custom_call.1} parent=5 // pred_check
        %p399 = pneg %p398
      $region54: #{tpu_custom_call.1} parent=5 // pred_check_branch
        %401 = sbr.rel (%p399) target = $region56
      $region55: #{tpu_custom_call.1} parent=5 // pred_region
        %s402 = ssub.s32 %s13, 2
        // Predicated region
        $region57: #{tpu_custom_call.1} parent=55 // pred_check
          %p403 = pneg %p103
        $region58: #{tpu_custom_call.1} parent=55 // pred_check_branch
          %405 = sbr.rel (%p403) target = $region60
        $region59: #{tpu_custom_call.1} parent=55 // pred_region
          %s406 = sand.u32 %s88, 1
          %s407 = scalar_lea.sflag [#allocation6], %s406
          %s408 = sand.u32 %s88, 1
          %s409 = smul.addr %s408, 32
          %s410 = scalar_lea.vmem [#allocation9], %s409
          %411 = dma.done %s407, 512
        $region60: #{tpu_custom_call.1} parent=55 // pred_fallthru
          _
      $region56: #{tpu_custom_call.1} parent=5 // pred_fallthru
        _
    $region6: #{tpu_custom_call.1} parent=1 // loop_footer
      %s17 = sadd.s32 1, %s13
    $region7: #{tpu_custom_call.1} parent=1 // loop_footer_branch
      %12 = sbr.rel target = $region3
    $region8: #{tpu_custom_call.1} parent=1 // loop_exit
      _
    %412 = vsyncpa [#allocation5], 1
    %s413 = scalar_lea.sflag [#allocation5], 1
    %414 = vsyncpa %s413, 1
    %415 = vsyncpa [#allocation8], 1
    %416 = vsyncpa [#allocation6], 1
    %s417 = scalar_lea.sflag [#allocation6], 1
    %418 = vsyncpa %s417, 1

// kernel: tpu_custom_call.1
$region0: #{tpu_custom_call.1}
  #allocation0 [shape = 'u32[]', space=smem, size = 0x4, offset = 0x4, fixed_abs, tag = 'smem constant byte address 0x4 - core index']
  #allocation1 [shape = 'u32[144,128]{1,0:T(1,128)}', space=vmem, size = 0x12000, scoped, tag = 'internal scratch']
  #allocation2 [shape = 'f32[32,128]{1,0:T(8,128)}', space=vmem, size = 0x4000, scoped, tag = 'scratch operand']
  #allocation3 [shape = 'f32[32,128]{1,0:T(8,128)}', space=vmem, size = 0x4000, scoped, tag = 'scratch operand']
  %s0 = inlined_call_operand.hbm [shape: f32[32,128], index: 0, kind: input, shape index: {}]
  %s1 = inlined_call_operand.hbm [shape: bf16[32,32], index: 1, kind: input, shape index: {}]
  %s2 = inlined_call_operand.hbm [shape: f32[3,32,128], index: 2, kind: output, shape index: {}]
  %s3 = sld [smem:[#allocation0]]
  $region61: #{tpu_custom_call.1} parent=0
    _
  %s5 = ssub.s32 1, %s3
  %s6 = scalar_select 0, %s5, %s3
  $region1: #{tpu_custom_call.1} parent=0
    #allocation4 [shape = 'u8[16384]{0}', space=vmem, size = 0x4000, scoped, tag = 'input window, operand 0, single buffered']
    #allocation5 [shape = 's32[2]{0}', space=sflag, size = 0x8, scoped, tag = 'scoped memory for tpu_custom_call.1']
    #allocation6 [shape = 's32[2]{0}', space=sflag, size = 0x8, scoped, tag = 'scoped memory for tpu_custom_call.1']
    #allocation7 [shape = 'u8[8192]{0}', space=vmem, size = 0x2000, scoped, tag = 'input window, operand 1, single buffered']
    #allocation8 [shape = 's32[1]{0}', space=sflag, size = 0x4, scoped, tag = 'scoped memory for tpu_custom_call.1']
    #allocation9 [shape = 'u8[32768]{0}', space=vmem, size = 0x8000, scoped, tag = 'output window, operand 0']
    %7 = vsyncpa [#allocation5], 0
    %8 = vsyncpa [#allocation8], 0
    %9 = vsyncpa [#allocation6], 0
    %s10 = scalar_lea.sflag [#allocation6], 1
    %11 = vsyncpa %s10, 0
    loop: start=0, step=1, limit=5
    $region2: #{tpu_custom_call.1} parent=1 // loop_pre_header
      _
    $region3: #{tpu_custom_call.1} parent=1 // loop_header
      %s13 = sphi 0, %s17
      %p14 = scmp.ge.s32.totalorder %s13, 5
      %s20 = sphi 0, %s32
      %s21 = sphi 0, %s28
      %s22 = sphi 0, %s20
      %s23 = sphi 0, %s21
      %s24 = sphi 0, %s22
      %s25 = sphi 0, %s23
      %s33 = sphi 0, %s33
      %s35 = sphi 0, %s33
      %s36 = sphi 0, %s35
      %s50 = sphi 0, %s36
      %s56 = sphi 0, %s58
      %s59 = sphi 0, %s56
      %s60 = sphi 0, %s59
      %s76 = sphi 0, %s60
      %s84 = sphi 0, %s86
      %s87 = sphi 0, %s84
      %s88 = sphi 0, %s87
      %s104 = sphi 0, %s88
    $region4: #{tpu_custom_call.1} parent=1 // loop_header_branch
      %16 = sbr.rel (%p14) target = $region8
    $region5: #{tpu_custom_call.1} parent=1 // loop_body
      %s18 = ssub.s32 %s13, 1
      %s19 = ssub.s32 %s13, 2
      %s26 = sadd.s32 1, %s21
      %p27 = scmp.ge.s32.totalorder %s26, 1
      %s28 = scalar_select %p27, 0, %s26
      %s29 = sadd.s32 1, %s20
      %s30 = scalar_select %p27, %s29, %s20
      %p31 = scmp.ge.s32.totalorder %s30, 3
      %s32 = scalar_select %p31, 0, %s30
      %s34 = sadd.s32 %s33, 1
      %p37 = scmp.eq.s32.totalorder %s13, 2
      %p38 = scmp.ne.s32.totalorder %s33, %s35
      %p39 = scmp.eq.s32.totalorder %s13, 0
      %p40 = por %p38, %p39
      %p41 = scmp.ne.s32.totalorder %s33, %s35
      %p42 = scmp.eq.s32.totalorder %s18, 2
      %p43 = por %p41, %p42
      %p44 = scmp.ne.s32.totalorder %s35, %s36
      %p45 = scmp.eq.s32.totalorder %s18, 0
      %p46 = por %p44, %p45
      %p47 = scmp.ne.s32.totalorder %s35, %s36
      %p48 = scmp.eq.s32.totalorder %s19, 2
      %p49 = por %p47, %p48
      %p51 = scmp.ne.s32.totalorder %s36, %s50
      %p52 = scmp.eq.s32.totalorder %s19, 0
      %p53 = por %p51, %p52
      %s54 = ssub.s32 %s21, %s28
      %p55 = scmp.eq.s32.totalorder %s54, 0
      %s57 = sadd.s32 %s56, 1
      %s58 = scalar_select %p55, %s56, %s57
      %p61 = pneg %p55
      %p62 = scmp.eq.s32.totalorder %s13, 2
      %p63 = por %p61, %p62
      %p64 = scmp.ne.s32.totalorder %s56, %s59
      %p65 = scmp.eq.s32.totalorder %s13, 0
      %p66 = por %p64, %p65
      %p67 = scmp.ne.s32.totalorder %s56, %s59
      %p68 = scmp.eq.s32.totalorder %s18, 2
      %p69 = por %p67, %p68
      %p70 = scmp.ne.s32.totalorder %s59, %s60
      %p71 = scmp.eq.s32.totalorder %s18, 0
      %p72 = por %p70, %p71
      %p73 = scmp.ne.s32.totalorder %s59, %s60
      %p74 = scmp.eq.s32.totalorder %s19, 2
      %p75 = por %p73, %p74
      %p77 = scmp.ne.s32.totalorder %s60, %s76
      %p78 = scmp.eq.s32.totalorder %s19, 0
      %p79 = por %p77, %p78
      %s80 = ssub.s32 %s20, %s32
      %s81 = ssub.s32 %s21, %s28
      %s82 = sor.u32 %s80, %s81
      %p83 = scmp.eq.s32.totalorder %s82, 0
      %s85 = sadd.s32 %s84, 1
      %s86 = scalar_select %p83, %s84, %s85
      %p89 = pneg %p83
      %p90 = scmp.eq.s32.totalorder %s13, 2
      %p91 = por %p89, %p90
      %p92 = scmp.ne.s32.totalorder %s84, %s87
      %p93 = scmp.eq.s32.totalorder %s13, 0
      %p94 = por %p92, %p93
      %p95 = scmp.ne.s32.totalorder %s84, %s87
      %p96 = scmp.eq.s32.totalorder %s18, 2
      %p97 = por %p95, %p96
      %p98 = scmp.ne.s32.totalorder %s87, %s88
      %p99 = scmp.eq.s32.totalorder %s18, 0
      %p100 = por %p98, %p99
      %p101 = scmp.ne.s32.totalorder %s87, %s88
      %p102 = scmp.eq.s32.totalorder %s19, 2
      %p103 = por %p101, %p102
      %p105 = scmp.ne.s32.totalorder %s88, %s104
      %p106 = scmp.eq.s32.totalorder %s19, 0
      %p107 = por %p105, %p106
      %p108 = scmp.le.s32.totalorder 1, %s13
      %p109 = scmp.lt.s32.totalorder %s13, 4
      %p110 = pnand %p108, %p109
      %p111 = pneg %p110
      // Predicated region
      $region9: #{tpu_custom_call.1} parent=5 // pred_check
        _
      $region10: #{tpu_custom_call.1} parent=5 // pred_check_branch
        %113 = sbr.rel (%p110) target = $region12
      $region11: #{tpu_custom_call.1} parent=5 // pred_region
        %s114 = ssub.s32 %s13, 1
        // Predicated region
        $region13: #{tpu_custom_call.1} parent=11 // pred_check
          %p115 = pneg %p46
        $region14: #{tpu_custom_call.1} parent=11 // pred_check_branch
          %117 = sbr.rel (%p115) target = $region16
        $region15: #{tpu_custom_call.1} parent=11 // pred_region
          %s119 = ssub.s32 512, 512
          %120 = vsyncadd [#allocation5], %s119
          %s121 = sshll.u32 [#allocation4], 4
          %s122 = int_to_ptr.vmem [resolvable:$true] %s121
          %127 = dma.hbm_to_vmem [thread:$0]  %s0, 512, %s122, [#allocation5], 128, 128, 8
        $region16: #{tpu_custom_call.1} parent=11 // pred_fallthru
          _
        // Predicated region
        $region17: #{tpu_custom_call.1} parent=11 // pred_check
          %p128 = pneg %p72
        $region18: #{tpu_custom_call.1} parent=11 // pred_check_branch
          %130 = sbr.rel (%p128) target = $region20
        $region19: #{tpu_custom_call.1} parent=11 // pred_region
          %s131 = smul.u32 4, %s23
          %s133 = ssub.s32 256, 256
          %134 = vsyncadd [#allocation8], %s133
          %s135 = smul.addr %s131, 64
          %s136 = scalar_lea.hbm %s1, %s135
          %s137 = sshll.u32 [#allocation7], 4
          %s138 = int_to_ptr.vmem [resolvable:$true] %s137
          %143 = dma.hbm_to_vmem [thread:$0]  %s136, 256, %s138, [#allocation8], 64, 64, 4
        $region20: #{tpu_custom_call.1} parent=11 // pred_fallthru
          _
      $region12: #{tpu_custom_call.1} parent=5 // pred_fallthru
        _
      %p144 = scmp.lt.s32.totalorder %s13, 3
      // Predicated region
      $region21: #{tpu_custom_call.1} parent=5 // pred_check
        %p145 = pneg %p144
      $region22: #{tpu_custom_call.1} parent=5 // pred_check_branch
        %147 = sbr.rel (%p145) target = $region24
      $region23: #{tpu_custom_call.1} parent=5 // pred_region
        _
      $region24: #{tpu_custom_call.1} parent=5 // pred_fallthru
        _
      %p148 = scmp.le.s32.totalorder 1, %s13
      %p149 = scmp.lt.s32.totalorder %s13, 4
      %p150 = pnand %p148, %p149
      %p151 = pneg %p150
      // Predicated region
      $region25: #{tpu_custom_call.1} parent=5 // pred_check
        _
      $region26: #{tpu_custom_call.1} parent=5 // pred_check_branch
        %153 = sbr.rel (%p150) target = $region28
      $region27: #{tpu_custom_call.1} parent=5 // pred_region
        %s154 = ssub.s32 %s13, 1
        // Predicated region
        $region29: #{tpu_custom_call.1} parent=27 // pred_check
          %p155 = pneg %p46
        $region30: #{tpu_custom_call.1} parent=27 // pred_check_branch
          %157 = sbr.rel (%p155) target = $region32
        $region31: #{tpu_custom_call.1} parent=27 // pred_region
          %158 = dma.done [#allocation5], 512
        $region32: #{tpu_custom_call.1} parent=27 // pred_fallthru
          _
        // Predicated region
        $region33: #{tpu_custom_call.1} parent=27 // pred_check
          %p159 = pneg %p72
        $region34: #{tpu_custom_call.1} parent=27 // pred_check_branch
          %161 = sbr.rel (%p159) target = $region36
        $region35: #{tpu_custom_call.1} parent=27 // pred_region
          %162 = dma.done [#allocation8], 256
        $region36: #{tpu_custom_call.1} parent=27 // pred_fallthru
          _
        %p163 = pneg %p46
        %p164 = pneg %p43
        %p165 = pneg %p72
        %p166 = pneg %p69
        %p167 = pneg %p100
        %p168 = pneg %p97
        %s169 = sand.u32 %s87, 1
        %s170 = scalar_lea.sflag [#allocation6], %s169
        %s171 = sand.u32 %s87, 1
        %s172 = smul.addr %s171, 32
        %s173 = scalar_lea.vmem [#allocation9], %s172
        %s174 = smul.u32 4, %s23
        %s175 = smul.u32 4, %s23
        %p177 = scmp.eq.s32.totalorder %s22, 0
        %p178 = scmp.eq.s32.totalorder %s23, 0
        %p179 = pnand %p177, %p178
        %p180 = pneg %p179
        // Predicated region
        $region37: #{tpu_custom_call.1} parent=27 // pred_check
          _
        $region38: #{tpu_custom_call.1} parent=27 // pred_check_branch
          %182 = sbr.rel (%p179) target = $region40
        $region39: #{tpu_custom_call.1} parent=27 // pred_region
          %v183 = vld [vmem:[#allocation4] sm:$0xff]
          %v184 = vld [vmem:[#allocation4 + $0x8] sm:$0xff]
          %v185 = vld [vmem:[#allocation4 + $0x10] sm:$0xff]
          %v186 = vld [vmem:[#allocation4 + $0x18] sm:$0xff]
          %187 = vst [vmem:[#allocation2] sm:$0xff] %v183
          %188 = vst [vmem:[#allocation2 + $0x8] sm:$0xff] %v184
          %189 = vst [vmem:[#allocation2 + $0x10] sm:$0xff] %v185
          %190 = vst [vmem:[#allocation2 + $0x18] sm:$0xff] %v186
        $region40: #{tpu_custom_call.1} parent=27 // pred_fallthru
          _
        %v191 = vld [vmem:[#allocation7] sm:$0xf]
        %v192 = vld [vmem:[#allocation7 + $0x4] sm:$0xf]
        %v193 = vld [vmem:[#allocation7 + $0x8] sm:$0xf]
        %v194 = vld [vmem:[#allocation7 + $0xc] sm:$0xf]
        %p195 = scmp.lt.s32.totalorder %s22, 0
        %s196 = ssub.s32 0, %s22
        %s197 = scalar_select %p195, %s196, %s22
        %s198 = sand.u32 %s197, 1
        %s199 = ssub.s32 0, %s198
        %s200 = scalar_select %p195, %s199, %s198
        %p201 = scmp.ne.s32.totalorder %s200, 0
        %p202 = scmp.lt.s32.totalorder %s200, 0
        %p203 = pnand %p202, %p201
        %p204 = pneg %p203
        %s205 = sadd.s32 %s200, 2
        %s206 = scalar_select %p204, %s205, %s200
        %p207 = scmp.eq.s32.totalorder %s206, 0
        // Predicated region
        $region41: #{tpu_custom_call.1} parent=27 // pred_check
          %p208 = pneg %p207
        $region42: #{tpu_custom_call.1} parent=27 // pred_check_branch
          %210 = sbr.rel (%p208) target = $region44
        $region43: #{tpu_custom_call.1} parent=27 // pred_region
          %v211 = vld [vmem:[#allocation2] sm:$0xff]
          %v212 = vld [vmem:[#allocation2 + $0x8] sm:$0xff]
          %v213 = vld [vmem:[#allocation2 + $0x10] sm:$0xff]
          %v214 = vld [vmem:[#allocation2 + $0x18] sm:$0xff]
          %v215 = vpack.c.bf16 %v212, %v211
          %v216 = vpack.c.bf16 %v214, %v213
          %v221 = vunpack.c.l.b16 %v191
          %v222 = vunpack.c.l.b16 %v192
          %v223 = vunpack.c.l.b16 %v193
          %v224 = vunpack.c.l.b16 %v194
          %v225 = vpack.c.b16 %v222, %v221
          %v226 = vpack.c.b16 %v224, %v223
          %vm227 = vcmask 261120
          %v229 = vsel %vm227, %v225, 0
          %v232 = vsel %vm227, %v226, 0
          %234 = vmatprep.subr.bf16.mxu0 0
          %235 = vmatpush1.bf16.msra.mxu0 %v215
          %236 = vmatprep.subr.bf16.mxu0 0
          %237 = vmatpush1.bf16.msra.mxu0 %v216
          %238 = vmatprep.subr.bf16.mxu0 0
          %239 = vmatpush1.bf16.msra.mxu0 0
          %240 = vmatprep.subr.bf16.mxu0 0
          %241 = vmatpush1.bf16.msra.mxu0 0
          %242 = vmatprep.subr.bf16.mxu0 0
          %243 = vmatpush1.bf16.msra.mxu0 0
          %244 = vmatprep.subr.bf16.mxu0 0
          %245 = vmatpush1.bf16.msra.mxu0 0
          %246 = vmatprep.subr.bf16.mxu0 0
          %247 = vmatpush1.bf16.msra.mxu0 0
          %248 = vmatprep.subr.bf16.mxu0 0
          %249 = vmatpush1.bf16.msra.mxu0 0
          %250 = vmatprep.subr.bf16.mxu0 0
          %251 = vmatpush1.bf16.msra.mxu0 0
          %252 = vmatprep.subr.bf16.mxu0 0
          %253 = vmatpush1.bf16.msra.mxu0 0
          %254 = vmatprep.subr.bf16.mxu0 0
          %255 = vmatpush1.bf16.msra.mxu0 0
          %256 = vmatprep.subr.bf16.mxu0 0
          %257 = vmatpush1.bf16.msra.mxu0 0
          %258 = vmatprep.subr.bf16.mxu0 0
          %259 = vmatpush1.bf16.msra.mxu0 0
          %260 = vmatprep.subr.bf16.mxu0 0
          %261 = vmatpush1.bf16.msra.mxu0 0
          %262 = vmatprep.subr.bf16.mxu0 0
          %263 = vmatpush1.bf16.msra.mxu0 0
          %264 = vmatprep.subr.bf16.mxu0 0
          %265 = vmatpush1.bf16.msra.mxu0 0
          %266 = vmatprep.mubr.bf16.mxu0 0
          %267 = vmatmul.mubr.bf16.gmra.mrb[0].mxu0 %v229
          %v268 = vpop.f32.mrb[0].mxu0
          %v269 = vadd.f32 0.0, %v268
          %v270 = vpop.f32.mrb[0].mxu0
          %v271 = vpop.f32.mrb[0].mxu0
          %v272 = vadd.f32 0.0, %v271
          %v273 = vpop.f32.mrb[0].mxu0
          %274 = vmatprep.mubr.bf16.mxu0 0
          %275 = vmatmul.mubr.bf16.gmra.mrb[0].mxu0 %v232
          %v276 = vpop.f32.mrb[0].mxu0
          %v277 = vadd.f32 0.0, %v276
          %v278 = vpop.f32.mrb[0].mxu0
          %v279 = vpop.f32.mrb[0].mxu0
          %v280 = vadd.f32 0.0, %v279
          %v281 = vpop.f32.mrb[0].mxu0
          %282 = vdwg.mxu0
          %283 = vst [vmem:[#allocation3] sm:$0xff] %v269
          %284 = vst [vmem:[#allocation3 + $0x8] sm:$0xff] %v272
          %285 = vst [vmem:[#allocation3 + $0x10] sm:$0xff] %v277
          %286 = vst [vmem:[#allocation3 + $0x18] sm:$0xff] %v280
          %287 = vst [vmem:[%s173] sm:$0xff] %v269
          %288 = vst [vmem:[%s173 + $0x8] sm:$0xff] %v272
          %289 = vst [vmem:[%s173 + $0x10] sm:$0xff] %v277
          %290 = vst [vmem:[%s173 + $0x18] sm:$0xff] %v280
        $region44: #{tpu_custom_call.1} parent=27 // pred_fallthru
          _
        %p291 = scmp.eq.s32.totalorder %s206, 1
        // Predicated region
        $region45: #{tpu_custom_call.1} parent=27 // pred_check
          %p292 = pneg %p291
        $region46: #{tpu_custom_call.1} parent=27 // pred_check_branch
          %294 = sbr.rel (%p292) target = $region48
        $region47: #{tpu_custom_call.1} parent=27 // pred_region
          %v295 = vld [vmem:[#allocation3] sm:$0xff]
          %v296 = vld [vmem:[#allocation3 + $0x8] sm:$0xff]
          %v297 = vld [vmem:[#allocation3 + $0x10] sm:$0xff]
          %v298 = vld [vmem:[#allocation3 + $0x18] sm:$0xff]
          %v299 = vpack.c.bf16 %v296, %v295
          %v300 = vpack.c.bf16 %v298, %v297
          %v305 = vunpack.c.l.b16 %v191
          %v306 = vunpack.c.l.b16 %v192
          %v307 = vunpack.c.l.b16 %v193
          %v308 = vunpack.c.l.b16 %v194
          %v309 = vpack.c.b16 %v306, %v305
          %v310 = vpack.c.b16 %v308, %v307
          %vm311 = vcmask 261120
          %v313 = vsel %vm311, %v309, 0
          %v316 = vsel %vm311, %v310, 0
          %318 = vmatprep.subr.bf16.mxu0 0
          %319 = vmatpush1.bf16.msra.mxu0 %v299
          %320 = vmatprep.subr.bf16.mxu0 0
          %321 = vmatpush1.bf16.msra.mxu0 %v300
          %322 = vmatprep.subr.bf16.mxu0 0
          %323 = vmatpush1.bf16.msra.mxu0 0
          %324 = vmatprep.subr.bf16.mxu0 0
          %325 = vmatpush1.bf16.msra.mxu0 0
          %326 = vmatprep.subr.bf16.mxu0 0
          %327 = vmatpush1.bf16.msra.mxu0 0
          %328 = vmatprep.subr.bf16.mxu0 0
          %329 = vmatpush1.bf16.msra.mxu0 0
          %330 = vmatprep.subr.bf16.mxu0 0
          %331 = vmatpush1.bf16.msra.mxu0 0
          %332 = vmatprep.subr.bf16.mxu0 0
          %333 = vmatpush1.bf16.msra.mxu0 0
          %334 = vmatprep.subr.bf16.mxu0 0
          %335 = vmatpush1.bf16.msra.mxu0 0
          %336 = vmatprep.subr.bf16.mxu0 0
          %337 = vmatpush1.bf16.msra.mxu0 0
          %338 = vmatprep.subr.bf16.mxu0 0
          %339 = vmatpush1.bf16.msra.mxu0 0
          %340 = vmatprep.subr.bf16.mxu0 0
          %341 = vmatpush1.bf16.msra.mxu0 0
          %342 = vmatprep.subr.bf16.mxu0 0
          %343 = vmatpush1.bf16.msra.mxu0 0
          %344 = vmatprep.subr.bf16.mxu0 0
          %345 = vmatpush1.bf16.msra.mxu0 0
          %346 = vmatprep.subr.bf16.mxu0 0
          %347 = vmatpush1.bf16.msra.mxu0 0
          %348 = vmatprep.subr.bf16.mxu0 0
          %349 = vmatpush1.bf16.msra.mxu0 0
          %350 = vmatprep.mubr.bf16.mxu0 0
          %351 = vmatmul.mubr.bf16.gmra.mrb[0].mxu0 %v313
          %v352 = vpop.f32.mrb[0].mxu0
          %v353 = vadd.f32 0.0, %v352
          %v354 = vpop.f32.mrb[0].mxu0
          %v355 = vpop.f32.mrb[0].mxu0
          %v356 = vadd.f32 0.0, %v355
          %v357 = vpop.f32.mrb[0].mxu0
          %358 = vmatprep.mubr.bf16.mxu0 0
          %359 = vmatmul.mubr.bf16.gmra.mrb[0].mxu0 %v316
          %v360 = vpop.f32.mrb[0].mxu0
          %v361 = vadd.f32 0.0, %v360
          %v362 = vpop.f32.mrb[0].mxu0
          %v363 = vpop.f32.mrb[0].mxu0
          %v364 = vadd.f32 0.0, %v363
          %v365 = vpop.f32.mrb[0].mxu0
          %366 = vdwg.mxu0
          %367 = vst [vmem:[#allocation2] sm:$0xff] %v353
          %368 = vst [vmem:[#allocation2 + $0x8] sm:$0xff] %v356
          %369 = vst [vmem:[#allocation2 + $0x10] sm:$0xff] %v361
          %370 = vst [vmem:[#allocation2 + $0x18] sm:$0xff] %v364
          %371 = vst [vmem:[%s173] sm:$0xff] %v353
          %372 = vst [vmem:[%s173 + $0x8] sm:$0xff] %v356
          %373 = vst [vmem:[%s173 + $0x10] sm:$0xff] %v361
          %374 = vst [vmem:[%s173 + $0x18] sm:$0xff] %v364
        $region48: #{tpu_custom_call.1} parent=27 // pred_fallthru
          _
        %s375 = sand.u32 %s87, 1
        %s376 = scalar_lea.sflag [#allocation6], %s375
        %s377 = sand.u32 %s87, 1
        %s378 = smul.addr %s377, 32
        %s379 = scalar_lea.vmem [#allocation9], %s378
        // Predicated region
        $region49: #{tpu_custom_call.1} parent=27 // pred_check
          %p380 = pneg %p97
        $region50: #{tpu_custom_call.1} parent=27 // pred_check_branch
          %382 = sbr.rel (%p380) target = $region52
        $region51: #{tpu_custom_call.1} parent=27 // pred_region
          %s383 = smul.u32 4, %s23
          %s385 = ssub.s32 512, 512
          %386 = vsyncadd %s376, %s385
          %s387 = smul.addr %s22, 4
          %s388 = sadd.s32 %s383, %s387
          %s389 = smul.addr %s388, 128
          %s390 = scalar_lea.hbm %s2, %s389
          %s391 = sshll.u32 %s379, 4
          %s392 = int_to_ptr.vmem [resolvable:$true] %s391
          %397 = dma.vmem_to_hbm [thread:$0]  %s392, 512, %s390, %s376, 128, 128, 8
        $region52: #{tpu_custom_call.1} parent=27 // pred_fallthru
          _
      $region28: #{tpu_custom_call.1} parent=5 // pred_fallthru
        _
      %p398 = scmp.le.s32.totalorder 2, %s13
      // Predicated region
      $region53: #{tpu_custom_call.1} parent=5 // pred_check
        %p399 = pneg %p398
      $region54: #{tpu_custom_call.1} parent=5 // pred_check_branch
        %401 = sbr.rel (%p399) target = $region56
      $region55: #{tpu_custom_call.1} parent=5 // pred_region
        %s402 = ssub.s32 %s13, 2
        // Predicated region
        $region57: #{tpu_custom_call.1} parent=55 // pred_check
          %p403 = pneg %p103
        $region58: #{tpu_custom_call.1} parent=55 // pred_check_branch
          %405 = sbr.rel (%p403) target = $region60
        $region59: #{tpu_custom_call.1} parent=55 // pred_region
          %s406 = sand.u32 %s88, 1
          %s407 = scalar_lea.sflag [#allocation6], %s406
          %s408 = sand.u32 %s88, 1
          %s409 = smul.addr %s408, 32
          %s410 = scalar_lea.vmem [#allocation9], %s409
          %411 = dma.done %s407, 512
        $region60: #{tpu_custom_call.1} parent=55 // pred_fallthru
          _
      $region56: #{tpu_custom_call.1} parent=5 // pred_fallthru
        _
    $region6: #{tpu_custom_call.1} parent=1 // loop_footer
      %s17 = sadd.s32 1, %s13
    $region7: #{tpu_custom_call.1} parent=1 // loop_footer_branch
      %12 = sbr.rel target = $region3
    $region8: #{tpu_custom_call.1} parent=1 // loop_exit
      _
    %412 = vsyncpa [#allocation5], 1
    %s413 = scalar_lea.sflag [#allocation5], 1
    %414 = vsyncpa %s413, 1
    %415 = vsyncpa [#allocation8], 1
    %416 = vsyncpa [#allocation6], 1
    %s417 = scalar_lea.sflag [#allocation6], 1
    %418 = vsyncpa %s417, 1

</llo_original>
